<compile_context>
chip_gen: v5e
topology: v5e:2x2
jax: 0.10.0
libtpu: 0.0.40
codegen_flags: <defaults>
</compile_context>

<pallas_src>
import functools

import jax
import jax.numpy as jnp
from jax.experimental import pallas as pl
from jax.experimental.pallas import tpu as pltpu


def _round_up(x, m):
    return ((x + m - 1) // m) * m


def qmodel_kernel(x_ref, w1_ref, b1_ref, w2_ref, b2_ref, o_ref):
    # x_ref : [obs_dim, TB]   (bf16 activations; batch on the lane axis)
    # w1_ref: [16, obs_dim]   b1_ref: [16, 1]
    # w2_ref: [A, 16]         b2_ref: [A, 1]
    # o_ref : [A, TB]
    x = x_ref[...].astype(jnp.float32)
    h = jnp.dot(w1_ref[...], x, preferred_element_type=jnp.float32) + b1_ref[...]
    h = jnp.tanh(h)                                       # EUP, f32 (v5e-safe)
    y = jnp.dot(w2_ref[...], h, preferred_element_type=jnp.float32) + b2_ref[...]
    o_ref[...] = y.astype(o_ref.dtype)


@functools.partial(jax.jit, static_argnames=("tile_b",))
def qmodel_forward(state, w1, b1, w2, b2, *, tile_b=1024):
    """Fused QModel forward: tanh(state @ w1.T + b1) @ w2.T + b2.

    state: [B, obs_dim] f32
    w1: [16, obs_dim], b1: [16]          (PyTorch nn.Linear convention)
    w2: [A, 16],       b2: [A]
    returns: [B, A] f32
    """
    B, obs_dim = state.shape
    hidden = w1.shape[0]
    nbr_actions = w2.shape[0]

    # Batch tile: multiple of 128 lanes, capped at tile_b. Pad the batch (only)
    # up to a tile boundary with zero columns; sliced off after the call.
    tb = min(tile_b, _round_up(B, 128))
    Bp = _round_up(B, tb)

    # Layout plumbing in the wrapper: batch onto the lane axis, bf16 over HBM.
    xT = jnp.transpose(state).astype(jnp.bfloat16)            # [obs_dim, B]
    if Bp != B:
        xT = jnp.pad(xT, ((0, 0), (0, Bp - B)))
    b1c = b1.reshape(hidden, 1).astype(jnp.float32)
    b2c = b2.reshape(nbr_actions, 1).astype(jnp.float32)
    w1f = w1.astype(jnp.float32)
    w2f = w2.astype(jnp.float32)

    grid = (Bp // tb,)
    flops = 2 * Bp * (obs_dim * hidden + hidden * nbr_actions)
    bytes_accessed = (
        xT.size * xT.dtype.itemsize
        + (w1f.size + b1c.size + w2f.size + b2c.size) * 4
        + nbr_actions * Bp * 4
    )

    yT = pl.pallas_call(
        qmodel_kernel,
        out_shape=jax.ShapeDtypeStruct((nbr_actions, Bp), jnp.float32),
        grid_spec=pltpu.PrefetchScalarGridSpec(
            num_scalar_prefetch=0,
            grid=grid,
            in_specs=[
                # batch-tiled activations (double-buffered by Pallas)
                pl.BlockSpec((obs_dim, tb), lambda i: (0, i)),
                # VMEM-resident weights / biases (constant index maps)
                pl.BlockSpec((hidden, obs_dim), lambda i: (0, 0)),
                pl.BlockSpec((hidden, 1), lambda i: (0, 0)),
                pl.BlockSpec((nbr_actions, hidden), lambda i: (0, 0)),
                pl.BlockSpec((nbr_actions, 1), lambda i: (0, 0)),
            ],
            out_specs=pl.BlockSpec((nbr_actions, tb), lambda i: (0, i)),
        ),
        compiler_params=pltpu.CompilerParams(
            dimension_semantics=("parallel",),
        ),
        cost_estimate=pl.CostEstimate(
            flops=flops,
            transcendentals=Bp * hidden,
            bytes_accessed=bytes_accessed,
        ),
    )(xT, w1f, b1c, w2f, b2c)

    return jnp.transpose(yT[:, :B])                            # [B, A]


def init_params(key, observation_dim, nbr_actions, hidden=16):
    # PyTorch nn.Linear-style shapes & uniform(-1/sqrt(fan_in), ...) init.
    k1, k2, k3, k4 = jax.random.split(key, 4)
    bound1 = 1.0 / jnp.sqrt(observation_dim)
    bound2 = 1.0 / jnp.sqrt(hidden)
    w1 = jax.random.uniform(k1, (hidden, observation_dim), jnp.float32, -bound1, bound1)
    b1 = jax.random.uniform(k2, (hidden,), jnp.float32, -bound1, bound1)
    w2 = jax.random.uniform(k3, (nbr_actions, hidden), jnp.float32, -bound2, bound2)
    b2 = jax.random.uniform(k4, (nbr_actions,), jnp.float32, -bound2, bound2)
    return w1, b1, w2, b2


if __name__ == "__main__":
    observation_dim = 4
    nbr_actions = 2
    batch = 8  # NOTE: at this size plain jnp is cheaper; kernel pays off at large B.

    key = jax.random.PRNGKey(0)
    kx, kp = jax.random.split(key)
    state = jax.random.normal(kx, (batch, observation_dim), jnp.float32)
    w1, b1, w2, b2 = init_params(kp, observation_dim, nbr_actions)

    out = qmodel_forward(state, w1, b1, w2, b2)
    out = jax.block_until_ready(out)

    # Reference in plain JAX (same bf16-rounded activations as the kernel path).
    x32 = state.astype(jnp.bfloat16).astype(jnp.float32)
    ref = jnp.tanh(x32 @ w1.T + b1) @ w2.T + b2
    assert out.shape == (batch, nbr_actions)
    assert jnp.allclose(out, ref, atol=2e-2, rtol=2e-2), "mismatch vs reference"

    print("KERNEL_OK")
</pallas_src>

<mosaic_0001>
module attributes {stable_mosaic.version = 11 : i64} {
  func.func @qmodel_kernel(%arg0: i32, %arg1: memref<4x128xbf16, #tpu.memory_space<vmem>>, %arg2: memref<16x4xf32, #tpu.memory_space<vmem>>, %arg3: memref<16x1xf32, #tpu.memory_space<vmem>>, %arg4: memref<2x16xf32, #tpu.memory_space<vmem>>, %arg5: memref<2x1xf32, #tpu.memory_space<vmem>>, %arg6: memref<2x128xf32, #tpu.memory_space<vmem>>) attributes {dimension_semantics = [#tpu.dimension_semantics<parallel>], iteration_bounds = array<i64: 1>, scalar_prefetch = 0 : i64, scratch_operands = 0 : i64, tpu.core_type = #tpu.core_type<tc>, window_params = [{transform_indices = @transform_0, window_bounds = array<i64: 4, 128>}, {pipeline_mode = #tpu.pipeline_mode<synchronous>, transform_indices = @transform_1, window_bounds = array<i64: 16, 4>}, {pipeline_mode = #tpu.pipeline_mode<synchronous>, transform_indices = @transform_2, window_bounds = array<i64: 16, 1>}, {pipeline_mode = #tpu.pipeline_mode<synchronous>, transform_indices = @transform_3, window_bounds = array<i64: 2, 16>}, {pipeline_mode = #tpu.pipeline_mode<synchronous>, transform_indices = @transform_4, window_bounds = array<i64: 2, 1>}, {transform_indices = @transform_5, window_bounds = array<i64: 2, 128>}]} {
    %c0 = arith.constant 0 : index
    %c0_0 = arith.constant 0 : index
    %0 = vector.load %arg1[%c0, %c0_0] : memref<4x128xbf16, #tpu.memory_space<vmem>>, vector<4x128xbf16>
    %1 = arith.extf %0 : vector<4x128xbf16> to vector<4x128xf32>
    %c0_1 = arith.constant 0 : index
    %c0_2 = arith.constant 0 : index
    %2 = vector.load %arg2[%c0_1, %c0_2] : memref<16x4xf32, #tpu.memory_space<vmem>>, vector<16x4xf32>
    %cst = arith.constant dense<0.000000e+00> : vector<16x128xf32>
    %3 = tpu.matmul %2, %1, %cst {dimension_numbers = #tpu.dot_dimension_numbers<[1], [0], [0], [1], [0, 0, 1, 1], [], []>} : vector<16x4xf32>, vector<4x128xf32>, vector<16x128xf32> -> vector<16x128xf32>
    %c0_3 = arith.constant 0 : index
    %c0_4 = arith.constant 0 : index
    %4 = vector.load %arg3[%c0_3, %c0_4] : memref<16x1xf32, #tpu.memory_space<vmem>>, vector<16x1xf32>
    %5 = vector.broadcast %4 : vector<16x1xf32> to vector<16x128xf32>
    %6 = arith.addf %3, %5 : vector<16x128xf32>
    %7 = math.tanh %6 : vector<16x128xf32>
    %c0_5 = arith.constant 0 : index
    %c0_6 = arith.constant 0 : index
    %8 = vector.load %arg4[%c0_5, %c0_6] : memref<2x16xf32, #tpu.memory_space<vmem>>, vector<2x16xf32>
    %cst_7 = arith.constant dense<0.000000e+00> : vector<2x128xf32>
    %9 = tpu.matmul %8, %7, %cst_7 {dimension_numbers = #tpu.dot_dimension_numbers<[1], [0], [0], [1], [0, 0, 1, 1], [], []>} : vector<2x16xf32>, vector<16x128xf32>, vector<2x128xf32> -> vector<2x128xf32>
    %c0_8 = arith.constant 0 : index
    %c0_9 = arith.constant 0 : index
    %10 = vector.load %arg5[%c0_8, %c0_9] : memref<2x1xf32, #tpu.memory_space<vmem>>, vector<2x1xf32>
    %11 = vector.broadcast %10 : vector<2x1xf32> to vector<2x128xf32>
    %12 = arith.addf %9, %11 : vector<2x128xf32>
    %c0_10 = arith.constant 0 : index
    %c0_11 = arith.constant 0 : index
    %13 = vector.load %arg6[%c0_10, %c0_11] : memref<2x128xf32, #tpu.memory_space<vmem>>, vector<2x128xf32>
    tpu.vector_store %arg6[%c0_10, %c0_11], %12 {strides = array<i32>} : memref<2x128xf32, #tpu.memory_space<vmem>>, vector<2x128xf32>,
    return
  }
  func.func @transform_0(%arg0: i32) -> (i32, i32) {
    %c0_i32 = arith.constant 0 : i32
    %c0_i32_0 = arith.constant 0 : i32
    return %c0_i32, %arg0 : i32, i32
  }
  func.func @transform_1(%arg0: i32) -> (i32, i32) {
    %c0_i32 = arith.constant 0 : i32
    %c0_i32_0 = arith.constant 0 : i32
    %c0_i32_1 = arith.constant 0 : i32
    return %c0_i32, %c0_i32_0 : i32, i32
  }
  func.func @transform_2(%arg0: i32) -> (i32, i32) {
    %c0_i32 = arith.constant 0 : i32
    %c0_i32_0 = arith.constant 0 : i32
    %c0_i32_1 = arith.constant 0 : i32
    return %c0_i32, %c0_i32_0 : i32, i32
  }
  func.func @transform_3(%arg0: i32) -> (i32, i32) {
    %c0_i32 = arith.constant 0 : i32
    %c0_i32_0 = arith.constant 0 : i32
    %c0_i32_1 = arith.constant 0 : i32
    return %c0_i32, %c0_i32_0 : i32, i32
  }
  func.func @transform_4(%arg0: i32) -> (i32, i32) {
    %c0_i32 = arith.constant 0 : i32
    %c0_i32_0 = arith.constant 0 : i32
    %c0_i32_1 = arith.constant 0 : i32
    return %c0_i32, %c0_i32_0 : i32, i32
  }
  func.func @transform_5(%arg0: i32) -> (i32, i32) {
    %c0_i32 = arith.constant 0 : i32
    %c0_i32_0 = arith.constant 0 : i32
    return %c0_i32, %arg0 : i32, i32
  }
}

</mosaic_0001>

<llo_original>
// kernel: qmodel_forward.1
$region0: #{qmodel_forward.1}
  #allocation0 [shape = 'u32[]', space=smem, size = 0x4, offset = 0x4, fixed_abs, tag = 'smem constant byte address 0x4 - core index']
  #allocation1 [shape = 'u32[72,128]{1,0:T(1,128)}', space=vmem, size = 0x9000, scoped, tag = 'internal scratch']
  %s0 = inlined_call_operand.vmem [shape: bf16[4,128], index: 0, kind: input, shape index: {}]
  %s1 = inlined_call_operand.vmem [shape: f32[16,4], index: 1, kind: input, shape index: {}]
  %s2 = inlined_call_operand.vmem [shape: f32[16,1], index: 2, kind: input, shape index: {}]
  %s3 = inlined_call_operand.vmem [shape: f32[2,16], index: 3, kind: input, shape index: {}]
  %s4 = inlined_call_operand.vmem [shape: f32[2,1], index: 4, kind: input, shape index: {}]
  %s5 = inlined_call_operand.vmem [shape: f32[2,128], index: 5, kind: output, shape index: {}]
  %s6 = sld [smem:[#allocation0]]
  $region30: #{qmodel_forward.1} parent=0
    _
  %s8 = ssub.s32 1, %s6
  %s9 = scalar_select 0, %s8, %s6
  // Predicated region
  $region2: #{qmodel_forward.1} parent=0 // pred_check
    _
  $region3: #{qmodel_forward.1} parent=0 // pred_check_branch
    %11 = sbr.rel (0) target = $region5
  $region4: #{qmodel_forward.1} parent=0 // pred_region
    _
  $region5: #{qmodel_forward.1} parent=0 // pred_fallthru
    _
  // Predicated region
  $region6: #{qmodel_forward.1} parent=0 // pred_check
    _
  $region7: #{qmodel_forward.1} parent=0 // pred_check_branch
    %13 = sbr.rel (0) target = $region9
  $region8: #{qmodel_forward.1} parent=0 // pred_region
    _
  $region9: #{qmodel_forward.1} parent=0 // pred_fallthru
    _
  // Predicated region
  $region10: #{qmodel_forward.1} parent=0 // pred_check
    _
  $region11: #{qmodel_forward.1} parent=0 // pred_check_branch
    %15 = sbr.rel (0) target = $region13
  $region12: #{qmodel_forward.1} parent=0 // pred_region
    _
  $region13: #{qmodel_forward.1} parent=0 // pred_fallthru
    _
  // Predicated region
  $region14: #{qmodel_forward.1} parent=0 // pred_check
    _
  $region15: #{qmodel_forward.1} parent=0 // pred_check_branch
    %17 = sbr.rel (0) target = $region17
  $region16: #{qmodel_forward.1} parent=0 // pred_region
    _
  $region17: #{qmodel_forward.1} parent=0 // pred_fallthru
    _
  // Predicated region
  $region18: #{qmodel_forward.1} parent=0 // pred_check
    _
  $region19: #{qmodel_forward.1} parent=0 // pred_check_branch
    %19 = sbr.rel (0) target = $region21
  $region20: #{qmodel_forward.1} parent=0 // pred_region
    _
  $region21: #{qmodel_forward.1} parent=0 // pred_fallthru
    _
  %v20 = vld [vmem:[%s0] sm:$0x3]
  %v21 = vunpack.c.l.bf16 %v20
  %v22 = vld [vmem:[%s1] sm:$0xff]
  %v23 = vld [vmem:[%s1 + $0x8] sm:$0xff]
  %v24 = vld [vmem:[%s2] sm:$0xff]
  %v25 = vld [vmem:[%s2 + $0x8] sm:$0xff]
  %27 = vset.pattern.permute.xlu0 0
  %28 = vperm.xlu0 %27, %v24
  %v29 = vpop.permute.xlu0 %28
  %32 = vset.pattern.permute.xlu0 0
  %33 = vperm.xlu0 %32, %v25
  %v34 = vpop.permute.xlu0 %33
  %vm36 = vcmask 31744
  %v38 = vsel %vm36, %v22, 0
  %v41 = vsel %vm36, %v23, 0
  %vm43 = vcmask 1043456
  %v45 = vsel %vm43, %v21, 0
  %47 = vmatpush.msra.mxu0 0.0
  %48 = vmatpush.msra.mxu0 0.0
  %49 = vmatpush.msra.mxu0 0.0
  %50 = vmatpush.msra.mxu0 0.0
  %51 = vmatpush.msra.mxu0 0.0
  %52 = vmatpush.msra.mxu0 0.0
  %53 = vmatpush.msra.mxu0 0.0
  %54 = vmatpush.msra.mxu0 0.0
  %55 = vmatpush.msra.mxu0 0.0
  %56 = vmatpush.msra.mxu0 0.0
  %57 = vmatpush.msra.mxu0 0.0
  %58 = vmatpush.msra.mxu0 0.0
  %59 = vmatpush.msra.mxu0 0.0
  %60 = vmatpush.msra.mxu0 0.0
  %61 = vmatpush.msra.mxu0 0.0
  %62 = vmatpush.msra.mxu0 %v45
  %63 = vmatmul.f32.gmra.mxu0 %v38
  %v64 = vpop.f32.mrf.mxu0
  %v65 = vadd.f32 %v29, %v64
  %66 = vmatmul.f32.gmra.mxu0 %v41
  %v67 = vpop.f32.mrf.mxu0
  %v68 = vadd.f32 %v34, %v67
  %69 = vdwg.mxu0
  %v70 = vtanh.pop %v65
  %v71 = vtanh.pop %v68
  %v72 = vld [vmem:[%s3] sm:$0x3]
  %v73 = vld [vmem:[%s4] sm:$0x3]
  %75 = vset.pattern.permute.xlu0 0
  %76 = vperm.xlu0 %75, %v73
  %v77 = vpop.permute.xlu0 %76
  %vm79 = vcmask 130048
  %v81 = vsel %vm79, %v72, 0
  %83 = vmatpush.msra.mxu0 0.0
  %84 = vmatpush.msra.mxu0 0.0
  %85 = vmatpush.msra.mxu0 0.0
  %86 = vmatpush.msra.mxu0 0.0
  %87 = vmatpush.msra.mxu0 0.0
  %88 = vmatpush.msra.mxu0 0.0
  %89 = vmatpush.msra.mxu0 0.0
  %90 = vmatpush.msra.mxu0 0.0
  %91 = vmatpush.msra.mxu0 0.0
  %92 = vmatpush.msra.mxu0 0.0
  %93 = vmatpush.msra.mxu0 0.0
  %94 = vmatpush.msra.mxu0 0.0
  %95 = vmatpush.msra.mxu0 0.0
  %96 = vmatpush.msra.mxu0 0.0
  %97 = vmatpush.msra.mxu0 %v71
  %98 = vmatpush.msra.mxu0 %v70
  %99 = vmatmul.f32.gmra.mxu0 %v81
  %v100 = vpop.f32.mrf.mxu0
  %v101 = vadd.f32 %v77, %v100
  %102 = vdwg.mxu0
  %103 = vst [vmem:[%s5] sm:$0x3] %v101
  // Predicated region
  $region22: #{qmodel_forward.1} parent=0 // pred_check
    _
  $region23: #{qmodel_forward.1} parent=0 // pred_check_branch
    %105 = sbr.rel (0) target = $region25
  $region24: #{qmodel_forward.1} parent=0 // pred_region
    _
  $region25: #{qmodel_forward.1} parent=0 // pred_fallthru
    _
  // Predicated region
  $region26: #{qmodel_forward.1} parent=0 // pred_check
    _
  $region27: #{qmodel_forward.1} parent=0 // pred_check_branch
    %107 = sbr.rel (0) target = $region29
  $region28: #{qmodel_forward.1} parent=0 // pred_region
    _
  $region29: #{qmodel_forward.1} parent=0 // pred_fallthru
    _

</llo_original>
